<compile_context>
chip_gen: v5e
topology: v5e:2x2
jax: 0.10.0
libtpu: 0.0.40
codegen_flags: <defaults>
</compile_context>

<pallas_src>
import numpy as np
import jax
import jax.numpy as jnp
from jax import lax
from jax.experimental import pallas as pl
from jax.experimental.pallas import tpu as pltpu

LEAKY_SLOPE = 0.01          # nn.LeakyReLU default
IN_CHANNELS = 1
HIDDEN_CHANNELS = [4, 8]    # hidden_channels arg of ConditionalCritic
KERNEL_SIZE = 5
STRIDE = 2

# Geometry forced by dense_layer = Linear(hidden_channels[-1] * 5, ...):
# with k=5, s=2, valid convs, H: 29 -> 13 -> 5 and W: (7+6)=13 -> 5 -> 1,
# so the final conv output is (B, 8, 5, 1) and flatten = 8*5 = 40 features.
H, X_W, C_W = 29, 7, 6


def _conv_out(n):
    return (n - KERNEL_SIZE) // STRIDE + 1


H1, W1 = _conv_out(H), _conv_out(X_W + C_W)            # 13, 5
H2, W2 = _conv_out(H1), _conv_out(W1)                  # 5, 1
F1 = HIDDEN_CHANNELS[0] * H1 * W1                      # 260 (conv1 output features)
F2 = HIDDEN_CHANNELS[1]                                # 8   (after conv2+dense fold)

# Packed-operand layout (all static Python ints, closed over by the kernel).
N_X = IN_CHANNELS * H * X_W                            # 203 rows of conv1 matrix for x
N_C = IN_CHANNELS * H * C_W                            # 174 rows of conv1 matrix for c
ROW_C = -(-N_X // 16) * 16                             # 208: bf16 sublane-tile aligned start of c block
W1_ROWS = -(-(ROW_C + N_C) // 16) * 16                 # 384: total rows of the bf16 weight blob
OFF_B2 = -(-F1 // 128) * 128                           # 384: lane-aligned start of folded conv2+dense bias
OFF_WO = OFF_B2 + 128                                  # 512: lane-aligned start of out-layer row
BIAS_LANES = OFF_WO + 128                              # 640: total lanes of the f32 bias blob


# --------------------------------------------------------------------------
# The single fused kernel:
#   LeakyReLU -> conv1 (as 2 matmuls on split cat(x,c)) -> LeakyReLU
#   -> [conv2 ∘ dense] (one folded 260->8 matmul) -> LeakyReLU -> out (VPU/XLU tail)
# --------------------------------------------------------------------------
def _critic_kernel(x_ref, c_ref, w1_ref, g2d_ref, bias_ref, o_ref):
    def leaky(v):                       # f32 epilogue everywhere (v5e-safe)
        return jnp.where(v >= 0, v, LEAKY_SLOPE * v)

    # --- activation on inputs; only MXU operands go bf16 ---
    ax = leaky(x_ref[...]).astype(jnp.bfloat16)                       # (B, 203)
    ac = leaky(c_ref[...]).astype(jnp.bfloat16)                       # (B, 174)

    # --- conv1 (1 -> 4, k5, s2); cat(x, c) handled by the split weight blob ---
    # Sub-slices of the packed blob start at 16-row-aligned offsets -> cheap views.
    h = (jnp.dot(ax, w1_ref[0:N_X, :], preferred_element_type=jnp.float32)
         + jnp.dot(ac, w1_ref[ROW_C:ROW_C + N_C, :], preferred_element_type=jnp.float32)
         + bias_ref[:, 0:F1])                                         # (B, 260) f32

    # --- LeakyReLU, then conv2 (4 -> 8) folded with dense (40 -> 8): one matmul ---
    h = (jnp.dot(leaky(h).astype(jnp.bfloat16), g2d_ref[...],
                 preferred_element_type=jnp.float32)
         + bias_ref[:, OFF_B2:OFF_B2 + F2])                           # (B, 8) f32

    # --- LeakyReLU + out layer (8 -> 1, no bias): broadcast-mul (VPU) + lane reduce (XLU) ---
    o_ref[...] = jnp.sum(leaky(h) * bias_ref[:, OFF_WO:OFF_WO + F2],
                         axis=-1, keepdims=True).astype(o_ref.dtype)


@jax.jit
def conditional_critic(params, x, c):
    """x: (B, Cin, H, Wx), c: (B, Cin, H, Wc) -> (B, 1). Works for any B."""
    B = x.shape[0]
    xf = x.reshape(B, -1).astype(jnp.float32)   # NCHW flatten (contiguous -> free view)
    cf = c.reshape(B, -1).astype(jnp.float32)

    flops = 2 * B * (N_X * F1 + N_C * F1 + F1 * F2 + F2)
    bytes_accessed = (B * N_X * 4 + B * N_C * 4
                      + W1_ROWS * F1 * 2 + F1 * F2 * 2 + BIAS_LANES * 4
                      + B * 4)

    vmem = pl.BlockSpec(memory_space=pltpu.MemorySpace.VMEM)
    return pl.pallas_call(
        _critic_kernel,
        out_shape=jax.ShapeDtypeStruct((B, 1), jnp.float32),
        in_specs=[vmem] * 5,
        out_specs=vmem,
        cost_estimate=pl.CostEstimate(flops=flops, transcendentals=0,
                                      bytes_accessed=bytes_accessed),
    )(xf, cf, params["w1"], params["g2d"], params["bias"])


# --------------------------------------------------------------------------
# Host-side setup: fold each Conv2d(k=5, s=2, valid) into a dense matrix
# acting on the NCHW-flattened activation (exact linear-algebra rewrite).
# --------------------------------------------------------------------------
def conv_as_matrix(w, b, hh, ww, stride):
    """w: (Cout, Cin, K, K), b: (Cout,). Returns G: (Cin*H*W, Cout*Ho*Wo), bias row."""
    w = np.asarray(w, np.float32)
    b = np.asarray(b, np.float32)
    cout, cin, k, _ = w.shape
    ho = (hh - k) // stride + 1
    wo = (ww - k) // stride + 1
    G = np.zeros((cin, hh, ww, cout, ho, wo), np.float32)
    for kh in range(k):
        for kw in range(k):
            tap = w[:, :, kh, kw].T                       # (Cin, Cout)
            for oh in range(ho):
                for ow in range(wo):
                    G[:, stride * oh + kh, stride * ow + kw, :, oh, ow] += tap
    G = G.reshape(cin * hh * ww, cout * ho * wo)
    bias_row = np.repeat(b, ho * wo)[None, :]             # (1, Cout*Ho*Wo), (co, ho, wo) order
    return G, bias_row, (cout, ho, wo)


def build_kernel_params(raw):
    """Precompute all kernel operands (done once, outside the jitted forward)."""
    (w1, b1), (w2, b2) = raw["convs"]
    cin = int(w1.shape[1])

    # conv1 matrix on the flattened cat(x, c), split row-wise into the x / c halves.
    G1, b1row, (_, h1o, w1o) = conv_as_matrix(w1, b1, H, X_W + C_W, STRIDE)
    G1r = G1.reshape(cin, H, X_W + C_W, G1.shape[1])
    g1x = G1r[:, :, :X_W, :].reshape(N_X, F1)
    g1c = G1r[:, :, X_W:, :].reshape(N_C, F1)

    # conv2 matrix, then fold the dense layer in f32 (exact: no activation between).
    G2, b2row, (c2, h2o, w2o) = conv_as_matrix(w2, b2, h1o, w1o, STRIDE)
    assert c2 * h2o * w2o == raw["wd"].shape[1], (c2, h2o, w2o, raw["wd"].shape)
    wdT = np.asarray(raw["wd"], np.float32).T                           # (40, 8)
    g2d = G2 @ wdT                                                      # (260, 8) f32
    b2d = b2row @ wdT + np.asarray(raw["bd"], np.float32)[None, :]      # (1, 8) f32

    # Pack the two conv1 matrices into one bf16 blob (16-row aligned block starts).
    w1_blob = np.zeros((W1_ROWS, F1), np.float32)
    w1_blob[0:N_X] = g1x
    w1_blob[ROW_C:ROW_C + N_C] = g1c

    # Pack all f32 row vectors into one bias blob (128-lane aligned block starts).
    bias_blob = np.zeros((1, BIAS_LANES), np.float32)
    bias_blob[0, 0:F1] = b1row[0]
    bias_blob[0, OFF_B2:OFF_B2 + F2] = b2d[0]
    bias_blob[0, OFF_WO:OFF_WO + F2] = np.asarray(raw["wo"], np.float32)[0]

    return {
        "w1": jnp.asarray(w1_blob, jnp.bfloat16),    # MXU operand
        "g2d": jnp.asarray(g2d, jnp.bfloat16),       # MXU operand (conv2 ∘ dense)
        "bias": jnp.asarray(bias_blob, jnp.float32), # f32 epilogue blob
    }


# --------------------------------------------------------------------------
# Deterministic parameter init (PyTorch-like fan-in uniform) + pure-JAX reference
# --------------------------------------------------------------------------
def _uniform(key, shape, bound):
    return jax.random.uniform(key, shape, jnp.float32, -bound, bound)


def init_raw_params(key):
    hc = [IN_CHANNELS] + HIDDEN_CHANNELS
    ks = iter(jax.random.split(key, 2 * (len(hc) - 1) + 3))
    convs = []
    for i in range(len(hc) - 1):
        bound = 1.0 / np.sqrt(hc[i] * KERNEL_SIZE * KERNEL_SIZE)
        w = _uniform(next(ks), (hc[i + 1], hc[i], KERNEL_SIZE, KERNEL_SIZE), bound)
        b = _uniform(next(ks), (hc[i + 1],), bound)
        convs.append((w, b))
    bound = 1.0 / np.sqrt(hc[-1] * 5)
    wd = _uniform(next(ks), (hc[-1], hc[-1] * 5), bound)
    bd = _uniform(next(ks), (hc[-1],), bound)
    bound = 1.0 / np.sqrt(hc[-1])
    wo = _uniform(next(ks), (1, hc[-1]), bound)
    return {"convs": convs, "wd": wd, "bd": bd, "wo": wo}


def reference_forward(raw, x, c):
    """Pure-JAX f32 mirror of ConditionalCritic.forward (for a tolerance check)."""
    h = jnp.concatenate([x, c], axis=-1)
    for w, b in raw["convs"]:
        h = jnp.where(h >= 0, h, LEAKY_SLOPE * h)
        h = lax.conv_general_dilated(
            h, w, window_strides=(STRIDE, STRIDE), padding="VALID",
            dimension_numbers=("NCHW", "OIHW", "NCHW")) + b.reshape(1, -1, 1, 1)
    h = h.reshape(h.shape[0], -1)
    h = h @ raw["wd"].T + raw["bd"]
    h = jnp.where(h >= 0, h, LEAKY_SLOPE * h)
    return h @ raw["wo"].T


# --------------------------------------------------------------------------
if __name__ == "__main__":
    root = jax.random.PRNGKey(0)
    kp, kx, kc = jax.random.split(root, 3)
    raw = init_raw_params(kp)

    B = 2
    x = jax.random.normal(kx, (B, IN_CHANNELS, H, X_W), jnp.float32)
    c = jax.random.normal(kc, (B, IN_CHANNELS, H, C_W), jnp.float32)

    params = build_kernel_params(raw)

    out = jax.block_until_ready(conditional_critic(params, x, c))
    assert out.shape == (B, 1), out.shape
    assert bool(jnp.all(jnp.isfinite(out)))

    # bf16 conv operands vs f32 reference: generous tolerance.
    ref = jax.block_until_ready(reference_forward(raw, x, c))
    max_err = float(jnp.max(jnp.abs(out - ref)))
    assert max_err < 1e-1, max_err

    print("KERNEL_OK")
</pallas_src>

<mosaic_0001>
module attributes {stable_mosaic.version = 11 : i64} {
  func.func @_critic_kernel(%arg0: memref<2x203xf32, #tpu.memory_space<vmem>>, %arg1: memref<2x174xf32, #tpu.memory_space<vmem>>, %arg2: memref<384x260xbf16, #tpu.memory_space<vmem>>, %arg3: memref<260x8xbf16, #tpu.memory_space<vmem>>, %arg4: memref<1x640xf32, #tpu.memory_space<vmem>>, %arg5: memref<2x1xf32, #tpu.memory_space<vmem>>) attributes {dimension_semantics = [], scalar_prefetch = 0 : i64, scratch_operands = 0 : i64, tpu.core_type = #tpu.core_type<tc>} {
    %c0 = arith.constant 0 : index
    %c0_0 = arith.constant 0 : index
    %0 = vector.load %arg0[%c0, %c0_0] : memref<2x203xf32, #tpu.memory_space<vmem>>, vector<2x203xf32>
    %cst = arith.constant 0.000000e+00 : f32
    %1 = vector.broadcast %cst : f32 to vector<2x203xf32>
    %2 = arith.cmpf oge, %0, %1 : vector<2x203xf32>
    %cst_1 = arith.constant 0.00999999977 : f32
    %3 = vector.broadcast %cst_1 : f32 to vector<2x203xf32>
    %4 = arith.mulf %3, %0 : vector<2x203xf32>
    %5 = arith.select %2, %0, %4 : vector<2x203xi1>, vector<2x203xf32>
    %6 = arith.truncf %5 : vector<2x203xf32> to vector<2x203xbf16>
    %c0_2 = arith.constant 0 : index
    %c0_3 = arith.constant 0 : index
    %7 = vector.load %arg1[%c0_2, %c0_3] : memref<2x174xf32, #tpu.memory_space<vmem>>, vector<2x174xf32>
    %cst_4 = arith.constant 0.000000e+00 : f32
    %8 = vector.broadcast %cst_4 : f32 to vector<2x174xf32>
    %9 = arith.cmpf oge, %7, %8 : vector<2x174xf32>
    %cst_5 = arith.constant 0.00999999977 : f32
    %10 = vector.broadcast %cst_5 : f32 to vector<2x174xf32>
    %11 = arith.mulf %10, %7 : vector<2x174xf32>
    %12 = arith.select %9, %7, %11 : vector<2x174xi1>, vector<2x174xf32>
    %13 = arith.truncf %12 : vector<2x174xf32> to vector<2x174xbf16>
    %c0_6 = arith.constant 0 : index
    %c0_7 = arith.constant 0 : index
    %14 = vector.load %arg2[%c0_6, %c0_7] : memref<384x260xbf16, #tpu.memory_space<vmem>>, vector<203x260xbf16>
    %cst_8 = arith.constant dense<0.000000e+00> : vector<2x260xf32>
    %15 = tpu.matmul %6, %14, %cst_8 {dimension_numbers = #tpu.dot_dimension_numbers<[1], [0], [0], [1], [0, 0, 1, 1], [], []>} : vector<2x203xbf16>, vector<203x260xbf16>, vector<2x260xf32> -> vector<2x260xf32>
    %c208 = arith.constant 208 : index
    %c0_9 = arith.constant 0 : index
    %16 = vector.load %arg2[%c208, %c0_9] : memref<384x260xbf16, #tpu.memory_space<vmem>>, vector<174x260xbf16>
    %cst_10 = arith.constant dense<0.000000e+00> : vector<2x260xf32>
    %17 = tpu.matmul %13, %16, %cst_10 {dimension_numbers = #tpu.dot_dimension_numbers<[1], [0], [0], [1], [0, 0, 1, 1], [], []>} : vector<2x174xbf16>, vector<174x260xbf16>, vector<2x260xf32> -> vector<2x260xf32>
    %18 = arith.addf %15, %17 : vector<2x260xf32>
    %c0_11 = arith.constant 0 : index
    %c0_12 = arith.constant 0 : index
    %19 = vector.load %arg4[%c0_11, %c0_12] : memref<1x640xf32, #tpu.memory_space<vmem>>, vector<1x260xf32>
    %20 = vector.broadcast %19 : vector<1x260xf32> to vector<2x260xf32>
    %21 = arith.addf %18, %20 : vector<2x260xf32>
    %cst_13 = arith.constant 0.000000e+00 : f32
    %22 = vector.broadcast %cst_13 : f32 to vector<2x260xf32>
    %23 = arith.cmpf oge, %21, %22 : vector<2x260xf32>
    %cst_14 = arith.constant 0.00999999977 : f32
    %24 = vector.broadcast %cst_14 : f32 to vector<2x260xf32>
    %25 = arith.mulf %24, %21 : vector<2x260xf32>
    %26 = arith.select %23, %21, %25 : vector<2x260xi1>, vector<2x260xf32>
    %27 = arith.truncf %26 : vector<2x260xf32> to vector<2x260xbf16>
    %c0_15 = arith.constant 0 : index
    %c0_16 = arith.constant 0 : index
    %28 = vector.load %arg3[%c0_15, %c0_16] : memref<260x8xbf16, #tpu.memory_space<vmem>>, vector<260x8xbf16>
    %cst_17 = arith.constant dense<0.000000e+00> : vector<2x8xf32>
    %29 = tpu.matmul %27, %28, %cst_17 {dimension_numbers = #tpu.dot_dimension_numbers<[1], [0], [0], [1], [0, 0, 1, 1], [], []>} : vector<2x260xbf16>, vector<260x8xbf16>, vector<2x8xf32> -> vector<2x8xf32>
    %c0_18 = arith.constant 0 : index
    %c384 = arith.constant 384 : index
    %30 = vector.load %arg4[%c0_18, %c384] : memref<1x640xf32, #tpu.memory_space<vmem>>, vector<1x8xf32>
    %31 = vector.broadcast %30 : vector<1x8xf32> to vector<2x8xf32>
    %32 = arith.addf %29, %31 : vector<2x8xf32>
    %cst_19 = arith.constant 0.000000e+00 : f32
    %33 = vector.broadcast %cst_19 : f32 to vector<2x8xf32>
    %34 = arith.cmpf oge, %32, %33 : vector<2x8xf32>
    %cst_20 = arith.constant 0.00999999977 : f32
    %35 = vector.broadcast %cst_20 : f32 to vector<2x8xf32>
    %36 = arith.mulf %35, %32 : vector<2x8xf32>
    %37 = arith.select %34, %32, %36 : vector<2x8xi1>, vector<2x8xf32>
    %c0_21 = arith.constant 0 : index
    %c512 = arith.constant 512 : index
    %38 = vector.load %arg4[%c0_21, %c512] : memref<1x640xf32, #tpu.memory_space<vmem>>, vector<1x8xf32>
    %39 = vector.broadcast %38 : vector<1x8xf32> to vector<2x8xf32>
    %40 = arith.mulf %37, %39 : vector<2x8xf32>
    %cst_22 = arith.constant dense<0.000000e+00> : vector<2xf32>
    %41 = vector.multi_reduction <add>, %40, %cst_22 [1] : vector<2x8xf32> to vector<2xf32>
    %42 = vector.shape_cast %41 : vector<2xf32> to vector<2x1xf32>
    %c0_23 = arith.constant 0 : index
    %c0_24 = arith.constant 0 : index
    %43 = vector.load %arg5[%c0_23, %c0_24] : memref<2x1xf32, #tpu.memory_space<vmem>>, vector<2x1xf32>
    tpu.vector_store %arg5[%c0_23, %c0_24], %42 {strides = array<i32>} : memref<2x1xf32, #tpu.memory_space<vmem>>, vector<2x1xf32>,
    return
  }
}

</mosaic_0001>

<llo_original>
// kernel: conditional_critic.1
$region0: #{conditional_critic.1}
  #allocation0 [shape = 'u32[]', space=smem, size = 0x4, offset = 0x4, fixed_abs, tag = 'smem constant byte address 0x4 - core index']
  #allocation1 [shape = 'u32[72,128]{1,0:T(1,128)}', space=vmem, size = 0x9000, scoped, tag = 'internal scratch']
  %s0 = inlined_call_operand.vmem [shape: f32[2,203], index: 0, kind: input, shape index: {}]
  %s1 = inlined_call_operand.vmem [shape: f32[2,174], index: 1, kind: input, shape index: {}]
  %s2 = inlined_call_operand.vmem [shape: bf16[384,260], index: 2, kind: input, shape index: {}]
  %s3 = inlined_call_operand.vmem [shape: bf16[260,8], index: 3, kind: input, shape index: {}]
  %s4 = inlined_call_operand.vmem [shape: f32[1,640], index: 4, kind: input, shape index: {}]
  %s5 = inlined_call_operand.vmem [shape: f32[2,1], index: 5, kind: output, shape index: {}]
  %s6 = sld [smem:[#allocation0]]
  $region30: #{conditional_critic.1} parent=0
    _
  %s8 = ssub.s32 1, %s6
  %s9 = scalar_select 0, %s8, %s6
  // Predicated region
  $region2: #{conditional_critic.1} parent=0 // pred_check
    _
  $region3: #{conditional_critic.1} parent=0 // pred_check_branch
    %11 = sbr.rel (0) target = $region5
  $region4: #{conditional_critic.1} parent=0 // pred_region
    _
  $region5: #{conditional_critic.1} parent=0 // pred_fallthru
    _
  // Predicated region
  $region6: #{conditional_critic.1} parent=0 // pred_check
    _
  $region7: #{conditional_critic.1} parent=0 // pred_check_branch
    %13 = sbr.rel (0) target = $region9
  $region8: #{conditional_critic.1} parent=0 // pred_region
    _
  $region9: #{conditional_critic.1} parent=0 // pred_fallthru
    _
  // Predicated region
  $region10: #{conditional_critic.1} parent=0 // pred_check
    _
  $region11: #{conditional_critic.1} parent=0 // pred_check_branch
    %15 = sbr.rel (0) target = $region13
  $region12: #{conditional_critic.1} parent=0 // pred_region
    _
  $region13: #{conditional_critic.1} parent=0 // pred_fallthru
    _
  // Predicated region
  $region14: #{conditional_critic.1} parent=0 // pred_check
    _
  $region15: #{conditional_critic.1} parent=0 // pred_check_branch
    %17 = sbr.rel (0) target = $region17
  $region16: #{conditional_critic.1} parent=0 // pred_region
    _
  $region17: #{conditional_critic.1} parent=0 // pred_fallthru
    _
  // Predicated region
  $region18: #{conditional_critic.1} parent=0 // pred_check
    _
  $region19: #{conditional_critic.1} parent=0 // pred_check_branch
    %19 = sbr.rel (0) target = $region21
  $region20: #{conditional_critic.1} parent=0 // pred_region
    _
  $region21: #{conditional_critic.1} parent=0 // pred_fallthru
    _
  %v21 = vld [vmem:[%s0] sm:$0xf]
  %vm22 = vcmp.ge.f32.partialorder %v21, 0.0
  %v23 = vmul.f32 %v21, 0.01
  %v24 = vsel %vm22, %v21, %v23
  %26 = vst [vmem:[#allocation1] ss:$4 sm:$0xff] %v24
  %v27 = vld.sshfl [vmem:[#allocation1] sm:$0xff pattern:$0x73625140]
  %v28 = vld.sshfl [vmem:[#allocation1 + $0x8] sm:$0xff pattern:$0x73625140]
  %v31 = vpack.c.bf16 %v27, %v27
  %v32 = vpack.c.bf16 %v28, %v28
  %v33 = vld [vmem:[%s1] sm:$0xf]
  %vm34 = vcmp.ge.f32.partialorder %v33, 0.0
  %v35 = vmul.f32 %v33, 0.01
  %v36 = vsel %vm34, %v33, %v35
  %38 = vst [vmem:[#allocation1] ss:$4 sm:$0xff] %v36
  %v39 = vld.sshfl [vmem:[#allocation1] sm:$0xff pattern:$0x73625140]
  %v40 = vld.sshfl [vmem:[#allocation1 + $0x8] sm:$0xff pattern:$0x73625140]
  %v43 = vpack.c.bf16 %v39, %v39
  %v44 = vpack.c.bf16 %v40, %v40
  %v45 = vld [vmem:[%s2] sm:$0xff]
  %v46 = vld [vmem:[%s2 + $0x8] sm:$0xf]
  %v47 = vld [vmem:[%s2 + $0xc] sm:$0xff]
  %v48 = vld [vmem:[%s2 + $0x14] sm:$0xf]
  %v49 = vld [vmem:[%s2 + $0x18] sm:$0xff]
  %v50 = vld [vmem:[%s2 + $0x20] sm:$0xf]
  %v51 = vld [vmem:[%s2 + $0x24] sm:$0xff]
  %v52 = vld [vmem:[%s2 + $0x2c] sm:$0xf]
  %v53 = vld [vmem:[%s2 + $0x30] sm:$0xff]
  %v54 = vld [vmem:[%s2 + $0x38] sm:$0xf]
  %v55 = vld [vmem:[%s2 + $0x3c] sm:$0xff]
  %v56 = vld [vmem:[%s2 + $0x44] sm:$0xf]
  %v57 = vld [vmem:[%s2 + $0x48] sm:$0xff]
  %v58 = vld [vmem:[%s2 + $0x50] sm:$0xf]
  %v59 = vld [vmem:[%s2 + $0x54] sm:$0xff]
  %v60 = vld [vmem:[%s2 + $0x5c] sm:$0xf]
  %v61 = vld [vmem:[%s2 + $0x60] sm:$0xff]
  %v62 = vld [vmem:[%s2 + $0x68] sm:$0xf]
  %v63 = vld [vmem:[%s2 + $0x6c] sm:$0xff]
  %v64 = vld [vmem:[%s2 + $0x74] sm:$0xf]
  %v65 = vld [vmem:[%s2 + $0x78] sm:$0xff]
  %v66 = vld [vmem:[%s2 + $0x80] sm:$0xf]
  %v67 = vld [vmem:[%s2 + $0x84] sm:$0xff]
  %v68 = vld [vmem:[%s2 + $0x8c] sm:$0xf]
  %v69 = vld [vmem:[%s2 + $0x90] sm:$0xff]
  %v70 = vld [vmem:[%s2 + $0x98] sm:$0xf]
  %v71 = vld [vmem:[%s2 + $0x9c] sm:$0xff]
  %v72 = vld [vmem:[%s2 + $0xa4] sm:$0xf]
  %v73 = vld [vmem:[%s2 + $0xa8] sm:$0xff]
  %v74 = vld [vmem:[%s2 + $0xb0] sm:$0xf]
  %v75 = vld [vmem:[%s2 + $0xb4] sm:$0xff]
  %v76 = vld [vmem:[%s2 + $0xbc] sm:$0xf]
  %v77 = vld [vmem:[%s2 + $0xc0] sm:$0xff]
  %v78 = vld [vmem:[%s2 + $0xc8] sm:$0xf]
  %v79 = vld [vmem:[%s2 + $0xcc] sm:$0xff]
  %v80 = vld [vmem:[%s2 + $0xd4] sm:$0xf]
  %v81 = vld [vmem:[%s2 + $0xd8] sm:$0xff]
  %v82 = vld [vmem:[%s2 + $0xe0] sm:$0xf]
  %v83 = vld [vmem:[%s2 + $0xe4] sm:$0xff]
  %v84 = vld [vmem:[%s2 + $0xec] sm:$0xf]
  %v85 = vld [vmem:[%s2 + $0xf0] sm:$0xff]
  %v86 = vld [vmem:[%s2 + $0xf8] sm:$0xf]
  %v87 = vld [vmem:[%s2 + $0xfc] sm:$0xff]
  %v88 = vld [vmem:[%s2 + $0x104] sm:$0xf]
  %v89 = vld [vmem:[%s2 + $0x108] sm:$0xff]
  %v90 = vld [vmem:[%s2 + $0x110] sm:$0xf]
  %v91 = vld [vmem:[%s2 + $0x114] sm:$0xff]
  %v92 = vld [vmem:[%s2 + $0x11c] sm:$0xf]
  %v93 = vld [vmem:[%s2 + $0x120] sm:$0xff]
  %v94 = vld [vmem:[%s2 + $0x128] sm:$0xf]
  %v95 = vld [vmem:[%s2 + $0x12c] sm:$0x33]
  %v96 = vld [vmem:[%s2 + $0x134] sm:$0x3]
  %v97 = vld [vmem:[%s2 + $0x138] sm:$0xff]
  %v98 = vld [vmem:[%s2 + $0x140] sm:$0xf]
  %v99 = vld [vmem:[%s2 + $0x144] sm:$0xff]
  %v100 = vld [vmem:[%s2 + $0x14c] sm:$0xf]
  %v101 = vld [vmem:[%s2 + $0x150] sm:$0xff]
  %v102 = vld [vmem:[%s2 + $0x158] sm:$0xf]
  %v103 = vld [vmem:[%s2 + $0x15c] sm:$0xff]
  %v104 = vld [vmem:[%s2 + $0x164] sm:$0xf]
  %v105 = vld [vmem:[%s2 + $0x168] sm:$0xff]
  %v106 = vld [vmem:[%s2 + $0x170] sm:$0xf]
  %v107 = vld [vmem:[%s2 + $0x174] sm:$0xff]
  %v108 = vld [vmem:[%s2 + $0x17c] sm:$0xf]
  %v109 = vld [vmem:[%s2 + $0x180] sm:$0xff]
  %v110 = vld [vmem:[%s2 + $0x188] sm:$0xf]
  %v111 = vld [vmem:[%s2 + $0x18c] sm:$0xff]
  %v112 = vld [vmem:[%s2 + $0x194] sm:$0xf]
  %v113 = vld [vmem:[%s2 + $0x198] sm:$0xff]
  %v114 = vld [vmem:[%s2 + $0x1a0] sm:$0xf]
  %v115 = vld [vmem:[%s2 + $0x1a4] sm:$0xff]
  %v116 = vld [vmem:[%s2 + $0x1ac] sm:$0xf]
  %v117 = vld [vmem:[%s2 + $0x1b0] sm:$0xff]
  %v118 = vld [vmem:[%s2 + $0x1b8] sm:$0xf]
  %v119 = vld [vmem:[%s2 + $0x1bc] sm:$0xff]
  %v120 = vld [vmem:[%s2 + $0x1c4] sm:$0xf]
  %v121 = vld [vmem:[%s2 + $0x1c8] sm:$0xff]
  %v122 = vld [vmem:[%s2 + $0x1d0] sm:$0xf]
  %v123 = vld [vmem:[%s2 + $0x1d4] sm:$0xff]
  %v124 = vld [vmem:[%s2 + $0x1dc] sm:$0xf]
  %v125 = vld [vmem:[%s2 + $0x1e0] sm:$0xff]
  %v126 = vld [vmem:[%s2 + $0x1e8] sm:$0xf]
  %v127 = vld [vmem:[%s2 + $0x1ec] sm:$0xff]
  %v128 = vld [vmem:[%s2 + $0x1f4] sm:$0xf]
  %v129 = vld [vmem:[%s2 + $0x1f8] sm:$0xff]
  %v130 = vld [vmem:[%s2 + $0x200] sm:$0xf]
  %v131 = vld [vmem:[%s2 + $0x204] sm:$0xff]
  %v132 = vld [vmem:[%s2 + $0x20c] sm:$0xf]
  %v133 = vld [vmem:[%s2 + $0x210] sm:$0xff]
  %v134 = vld [vmem:[%s2 + $0x218] sm:$0xf]
  %v135 = vld [vmem:[%s2 + $0x21c] sm:$0xff]
  %v136 = vld [vmem:[%s2 + $0x224] sm:$0xf]
  %v137 = vld [vmem:[%s2 + $0x228] sm:$0xff]
  %v138 = vld [vmem:[%s2 + $0x230] sm:$0xf]
  %v139 = vld [vmem:[%s2 + $0x234] sm:$0x77]
  %v140 = vld [vmem:[%s2 + $0x23c] sm:$0x7]
  %v185 = vunpack.c.l.b16 %v97
  %v186 = vunpack.c.h.b16 %v97
  %v187 = vunpack.c.l.b16 %v98
  %v188 = vunpack.c.l.b16 %v99
  %v189 = vunpack.c.h.b16 %v99
  %v190 = vunpack.c.l.b16 %v100
  %v191 = vunpack.c.l.b16 %v101
  %v192 = vunpack.c.h.b16 %v101
  %v193 = vunpack.c.l.b16 %v102
  %v194 = vunpack.c.l.b16 %v103
  %v195 = vunpack.c.h.b16 %v103
  %v196 = vunpack.c.l.b16 %v104
  %v197 = vunpack.c.l.b16 %v105
  %v198 = vunpack.c.h.b16 %v105
  %v199 = vunpack.c.l.b16 %v106
  %v200 = vunpack.c.l.b16 %v107
  %v201 = vunpack.c.h.b16 %v107
  %v202 = vunpack.c.l.b16 %v108
  %v203 = vunpack.c.l.b16 %v109
  %v204 = vunpack.c.h.b16 %v109
  %v205 = vunpack.c.l.b16 %v110
  %v206 = vunpack.c.l.b16 %v111
  %v207 = vunpack.c.h.b16 %v111
  %v208 = vunpack.c.l.b16 %v112
  %v209 = vunpack.c.l.b16 %v113
  %v210 = vunpack.c.h.b16 %v113
  %v211 = vunpack.c.l.b16 %v114
  %v212 = vunpack.c.l.b16 %v115
  %v213 = vunpack.c.h.b16 %v115
  %v214 = vunpack.c.l.b16 %v116
  %v215 = vunpack.c.l.b16 %v117
  %v216 = vunpack.c.h.b16 %v117
  %v217 = vunpack.c.l.b16 %v118
  %v218 = vunpack.c.l.b16 %v119
  %v219 = vunpack.c.h.b16 %v119
  %v220 = vunpack.c.l.b16 %v120
  %v221 = vunpack.c.l.b16 %v121
  %v222 = vunpack.c.h.b16 %v121
  %v223 = vunpack.c.l.b16 %v122
  %v224 = vunpack.c.l.b16 %v123
  %v225 = vunpack.c.h.b16 %v123
  %v226 = vunpack.c.l.b16 %v124
  %v227 = vunpack.c.l.b16 %v125
  %v228 = vunpack.c.h.b16 %v125
  %v229 = vunpack.c.l.b16 %v126
  %v230 = vunpack.c.l.b16 %v127
  %v231 = vunpack.c.h.b16 %v127
  %v232 = vunpack.c.l.b16 %v128
  %v233 = vunpack.c.l.b16 %v129
  %v234 = vunpack.c.h.b16 %v129
  %v235 = vunpack.c.l.b16 %v130
  %v236 = vunpack.c.l.b16 %v131
  %v237 = vunpack.c.h.b16 %v131
  %v238 = vunpack.c.l.b16 %v132
  %v239 = vunpack.c.l.b16 %v133
  %v240 = vunpack.c.h.b16 %v133
  %v241 = vunpack.c.l.b16 %v134
  %v242 = vunpack.c.l.b16 %v135
  %v243 = vunpack.c.h.b16 %v135
  %v244 = vunpack.c.l.b16 %v136
  %v245 = vunpack.c.l.b16 %v137
  %v246 = vunpack.c.h.b16 %v137
  %v247 = vunpack.c.l.b16 %v138
  %v248 = vunpack.c.l.b16 %v139
  %v249 = vunpack.c.h.b16 %v139
  %v250 = vunpack.c.l.b16 %v140
  %v251 = vpack.c.b16 %v188, %v185
  %v252 = vpack.c.b16 %v189, %v186
  %v253 = vpack.c.b16 %v190, %v187
  %v254 = vpack.c.b16 %v194, %v191
  %v255 = vpack.c.b16 %v195, %v192
  %v256 = vpack.c.b16 %v196, %v193
  %v257 = vpack.c.b16 %v200, %v197
  %v258 = vpack.c.b16 %v201, %v198
  %v259 = vpack.c.b16 %v202, %v199
  %v260 = vpack.c.b16 %v206, %v203
  %v261 = vpack.c.b16 %v207, %v204
  %v262 = vpack.c.b16 %v208, %v205
  %v263 = vpack.c.b16 %v212, %v209
  %v264 = vpack.c.b16 %v213, %v210
  %v265 = vpack.c.b16 %v214, %v211
  %v266 = vpack.c.b16 %v218, %v215
  %v267 = vpack.c.b16 %v219, %v216
  %v268 = vpack.c.b16 %v220, %v217
  %v269 = vpack.c.b16 %v224, %v221
  %v270 = vpack.c.b16 %v225, %v222
  %v271 = vpack.c.b16 %v226, %v223
  %v272 = vpack.c.b16 %v230, %v227
  %v273 = vpack.c.b16 %v231, %v228
  %v274 = vpack.c.b16 %v232, %v229
  %v275 = vpack.c.b16 %v236, %v233
  %v276 = vpack.c.b16 %v237, %v234
  %v277 = vpack.c.b16 %v238, %v235
  %v278 = vpack.c.b16 %v242, %v239
  %v279 = vpack.c.b16 %v243, %v240
  %v280 = vpack.c.b16 %v244, %v241
  %v281 = vpack.c.b16 %v248, %v245
  %v282 = vpack.c.b16 %v249, %v246
  %v283 = vpack.c.b16 %v250, %v247
  %vm314 = vcmask 375808
  %v316 = vsel %vm314, %v44, 0
  %vm318 = vcmask 1046528
  %v320 = vsel %vm318, %v281, 0
  %v323 = vsel %vm318, %v282, 0
  %v326 = vsel %vm318, %v283, 0
  %328 = vmatpush.bf16.msra.mxu0 %v272
  %329 = vmatpush.bf16.msra.mxu0 %v269
  %330 = vmatpush.bf16.msra.mxu0 %v266
  %331 = vmatpush.bf16.msra.mxu0 %v263
  %332 = vmatpush.bf16.msra.mxu0 %v260
  %333 = vmatpush.bf16.msra.mxu0 %v257
  %334 = vmatpush.bf16.msra.mxu0 %v254
  %335 = vmatpush.bf16.msra.mxu0 %v251
  %336 = vmatmul.bf16.gmra.mxu0 %v43
  %v337 = vpop.f32.mrf.mxu0
  %v338 = vadd.f32 0.0, %v337
  %v339 = vpop.f32.mrf.mxu0
  %340 = vdwg.mxu0
  %341 = vmatpush.bf16.msra.mxu0 0
  %342 = vmatpush.bf16.msra.mxu0 0
  %343 = vmatpush.bf16.msra.mxu0 0
  %344 = vmatpush.bf16.msra.mxu0 0
  %345 = vmatpush.bf16.msra.mxu0 0
  %346 = vmatpush.bf16.msra.mxu0 %v320
  %347 = vmatpush.bf16.msra.mxu0 %v278
  %348 = vmatpush.bf16.msra.mxu0 %v275
  %349 = vmatmul.bf16.gmra.mxu0 %v316
  %v350 = vpop.f32.mrf.mxu0
  %v351 = vadd.f32 %v338, %v350
  %v352 = vpop.f32.mrf.mxu0
  %353 = vdwg.mxu0
  %354 = vmatpush.bf16.msra.mxu0 %v273
  %355 = vmatpush.bf16.msra.mxu0 %v270
  %356 = vmatpush.bf16.msra.mxu0 %v267
  %357 = vmatpush.bf16.msra.mxu0 %v264
  %358 = vmatpush.bf16.msra.mxu0 %v261
  %359 = vmatpush.bf16.msra.mxu0 %v258
  %360 = vmatpush.bf16.msra.mxu0 %v255
  %361 = vmatpush.bf16.msra.mxu0 %v252
  %362 = vmatmul.bf16.gmra.mxu0 %v43
  %v363 = vpop.f32.mrf.mxu0
  %v364 = vadd.f32 0.0, %v363
  %v365 = vpop.f32.mrf.mxu0
  %366 = vdwg.mxu0
  %367 = vmatpush.bf16.msra.mxu0 0
  %368 = vmatpush.bf16.msra.mxu0 0
  %369 = vmatpush.bf16.msra.mxu0 0
  %370 = vmatpush.bf16.msra.mxu0 0
  %371 = vmatpush.bf16.msra.mxu0 0
  %372 = vmatpush.bf16.msra.mxu0 %v323
  %373 = vmatpush.bf16.msra.mxu0 %v279
  %374 = vmatpush.bf16.msra.mxu0 %v276
  %375 = vmatmul.bf16.gmra.mxu0 %v316
  %v376 = vpop.f32.mrf.mxu0
  %v377 = vadd.f32 %v364, %v376
  %v378 = vpop.f32.mrf.mxu0
  %379 = vdwg.mxu0
  %380 = vmatpush.bf16.msra.mxu0 %v274
  %381 = vmatpush.bf16.msra.mxu0 %v271
  %382 = vmatpush.bf16.msra.mxu0 %v268
  %383 = vmatpush.bf16.msra.mxu0 %v265
  %384 = vmatpush.bf16.msra.mxu0 %v262
  %385 = vmatpush.bf16.msra.mxu0 %v259
  %386 = vmatpush.bf16.msra.mxu0 %v256
  %387 = vmatpush.bf16.msra.mxu0 %v253
  %388 = vmatmul.bf16.gmra.mxu0 %v43
  %v389 = vpop.f32.mrf.mxu0
  %v390 = vadd.f32 0.0, %v389
  %v391 = vpop.f32.mrf.mxu0
  %392 = vdwg.mxu0
  %393 = vmatpush.bf16.msra.mxu0 0
  %394 = vmatpush.bf16.msra.mxu0 0
  %395 = vmatpush.bf16.msra.mxu0 0
  %396 = vmatpush.bf16.msra.mxu0 0
  %397 = vmatpush.bf16.msra.mxu0 0
  %398 = vmatpush.bf16.msra.mxu0 %v326
  %399 = vmatpush.bf16.msra.mxu0 %v280
  %400 = vmatpush.bf16.msra.mxu0 %v277
  %401 = vmatmul.bf16.gmra.mxu0 %v316
  %v402 = vpop.f32.mrf.mxu0
  %v403 = vadd.f32 %v390, %v402
  %v404 = vpop.f32.mrf.mxu0
  %405 = vdwg.mxu0
  %v458 = vunpack.c.l.b16 %v45
  %v459 = vunpack.c.h.b16 %v45
  %v460 = vunpack.c.l.b16 %v46
  %v461 = vunpack.c.l.b16 %v47
  %v462 = vunpack.c.h.b16 %v47
  %v463 = vunpack.c.l.b16 %v48
  %v464 = vunpack.c.l.b16 %v49
  %v465 = vunpack.c.h.b16 %v49
  %v466 = vunpack.c.l.b16 %v50
  %v467 = vunpack.c.l.b16 %v51
  %v468 = vunpack.c.h.b16 %v51
  %v469 = vunpack.c.l.b16 %v52
  %v470 = vunpack.c.l.b16 %v53
  %v471 = vunpack.c.h.b16 %v53
  %v472 = vunpack.c.l.b16 %v54
  %v473 = vunpack.c.l.b16 %v55
  %v474 = vunpack.c.h.b16 %v55
  %v475 = vunpack.c.l.b16 %v56
  %v476 = vunpack.c.l.b16 %v57
  %v477 = vunpack.c.h.b16 %v57
  %v478 = vunpack.c.l.b16 %v58
  %v479 = vunpack.c.l.b16 %v59
  %v480 = vunpack.c.h.b16 %v59
  %v481 = vunpack.c.l.b16 %v60
  %v482 = vunpack.c.l.b16 %v61
  %v483 = vunpack.c.h.b16 %v61
  %v484 = vunpack.c.l.b16 %v62
  %v485 = vunpack.c.l.b16 %v63
  %v486 = vunpack.c.h.b16 %v63
  %v487 = vunpack.c.l.b16 %v64
  %v488 = vunpack.c.l.b16 %v65
  %v489 = vunpack.c.h.b16 %v65
  %v490 = vunpack.c.l.b16 %v66
  %v491 = vunpack.c.l.b16 %v67
  %v492 = vunpack.c.h.b16 %v67
  %v493 = vunpack.c.l.b16 %v68
  %v494 = vunpack.c.l.b16 %v69
  %v495 = vunpack.c.h.b16 %v69
  %v496 = vunpack.c.l.b16 %v70
  %v497 = vunpack.c.l.b16 %v71
  %v498 = vunpack.c.h.b16 %v71
  %v499 = vunpack.c.l.b16 %v72
  %v500 = vunpack.c.l.b16 %v73
  %v501 = vunpack.c.h.b16 %v73
  %v502 = vunpack.c.l.b16 %v74
  %v503 = vunpack.c.l.b16 %v75
  %v504 = vunpack.c.h.b16 %v75
  %v505 = vunpack.c.l.b16 %v76
  %v506 = vunpack.c.l.b16 %v77
  %v507 = vunpack.c.h.b16 %v77
  %v508 = vunpack.c.l.b16 %v78
  %v509 = vunpack.c.l.b16 %v79
  %v510 = vunpack.c.h.b16 %v79
  %v511 = vunpack.c.l.b16 %v80
  %v512 = vunpack.c.l.b16 %v81
  %v513 = vunpack.c.h.b16 %v81
  %v514 = vunpack.c.l.b16 %v82
  %v515 = vunpack.c.l.b16 %v83
  %v516 = vunpack.c.h.b16 %v83
  %v517 = vunpack.c.l.b16 %v84
  %v518 = vunpack.c.l.b16 %v85
  %v519 = vunpack.c.h.b16 %v85
  %v520 = vunpack.c.l.b16 %v86
  %v521 = vunpack.c.l.b16 %v87
  %v522 = vunpack.c.h.b16 %v87
  %v523 = vunpack.c.l.b16 %v88
  %v524 = vunpack.c.l.b16 %v89
  %v525 = vunpack.c.h.b16 %v89
  %v526 = vunpack.c.l.b16 %v90
  %v527 = vunpack.c.l.b16 %v91
  %v528 = vunpack.c.h.b16 %v91
  %v529 = vunpack.c.l.b16 %v92
  %v530 = vunpack.c.l.b16 %v93
  %v531 = vunpack.c.h.b16 %v93
  %v532 = vunpack.c.l.b16 %v94
  %v533 = vunpack.c.l.b16 %v95
  %v534 = vunpack.c.h.b16 %v95
  %v535 = vunpack.c.l.b16 %v96
  %v536 = vpack.c.b16 %v461, %v458
  %v537 = vpack.c.b16 %v462, %v459
  %v538 = vpack.c.b16 %v463, %v460
  %v539 = vpack.c.b16 %v467, %v464
  %v540 = vpack.c.b16 %v468, %v465
  %v541 = vpack.c.b16 %v469, %v466
  %v542 = vpack.c.b16 %v473, %v470
  %v543 = vpack.c.b16 %v474, %v471
  %v544 = vpack.c.b16 %v475, %v472
  %v545 = vpack.c.b16 %v479, %v476
  %v546 = vpack.c.b16 %v480, %v477
  %v547 = vpack.c.b16 %v481, %v478
  %v548 = vpack.c.b16 %v485, %v482
  %v549 = vpack.c.b16 %v486, %v483
  %v550 = vpack.c.b16 %v487, %v484
  %v551 = vpack.c.b16 %v491, %v488
  %v552 = vpack.c.b16 %v492, %v489
  %v553 = vpack.c.b16 %v493, %v490
  %v554 = vpack.c.b16 %v497, %v494
  %v555 = vpack.c.b16 %v498, %v495
  %v556 = vpack.c.b16 %v499, %v496
  %v557 = vpack.c.b16 %v503, %v500
  %v558 = vpack.c.b16 %v504, %v501
  %v559 = vpack.c.b16 %v505, %v502
  %v560 = vpack.c.b16 %v509, %v506
  %v561 = vpack.c.b16 %v510, %v507
  %v562 = vpack.c.b16 %v511, %v508
  %v563 = vpack.c.b16 %v515, %v512
  %v564 = vpack.c.b16 %v516, %v513
  %v565 = vpack.c.b16 %v517, %v514
  %v566 = vpack.c.b16 %v521, %v518
  %v567 = vpack.c.b16 %v522, %v519
  %v568 = vpack.c.b16 %v523, %v520
  %v569 = vpack.c.b16 %v527, %v524
  %v570 = vpack.c.b16 %v528, %v525
  %v571 = vpack.c.b16 %v529, %v526
  %v572 = vpack.c.b16 %v533, %v530
  %v573 = vpack.c.b16 %v534, %v531
  %v574 = vpack.c.b16 %v535, %v532
  %vm611 = vcmask 613376
  %v613 = vsel %vm611, %v32, 0
  %vm615 = vcmask 1044480
  %vm616 = vcmask 1045504
  %v617 = vsel %vm615, 4294967295, 65535
  %v618 = vsel %vm616, %v617, 0
  %v620 = vand.u32 %v572, %v618
  %v623 = vand.u32 %v573, %v618
  %v626 = vand.u32 %v574, %v618
  %628 = vmatpush.bf16.msra.mxu0 %v557
  %629 = vmatpush.bf16.msra.mxu0 %v554
  %630 = vmatpush.bf16.msra.mxu0 %v551
  %631 = vmatpush.bf16.msra.mxu0 %v548
  %632 = vmatpush.bf16.msra.mxu0 %v545
  %633 = vmatpush.bf16.msra.mxu0 %v542
  %634 = vmatpush.bf16.msra.mxu0 %v539
  %635 = vmatpush.bf16.msra.mxu0 %v536
  %636 = vmatmul.bf16.gmra.mxu0 %v31
  %v637 = vpop.f32.mrf.mxu0
  %v638 = vadd.f32 %v351, %v637
  %v639 = vpop.f32.mrf.mxu0
  %640 = vdwg.mxu0
  %641 = vmatpush.bf16.msra.mxu0 0
  %642 = vmatpush.bf16.msra.mxu0 0
  %643 = vmatpush.bf16.msra.mxu0 0
  %644 = vmatpush.bf16.msra.mxu0 %v620
  %645 = vmatpush.bf16.msra.mxu0 %v569
  %646 = vmatpush.bf16.msra.mxu0 %v566
  %647 = vmatpush.bf16.msra.mxu0 %v563
  %648 = vmatpush.bf16.msra.mxu0 %v560
  %649 = vmatmul.bf16.gmra.mxu0 %v613
  %v650 = vpop.f32.mrf.mxu0
  %v651 = vadd.f32 %v638, %v650
  %v652 = vpop.f32.mrf.mxu0
  %653 = vdwg.mxu0
  %654 = vmatpush.bf16.msra.mxu0 %v558
  %655 = vmatpush.bf16.msra.mxu0 %v555
  %656 = vmatpush.bf16.msra.mxu0 %v552
  %657 = vmatpush.bf16.msra.mxu0 %v549
  %658 = vmatpush.bf16.msra.mxu0 %v546
  %659 = vmatpush.bf16.msra.mxu0 %v543
  %660 = vmatpush.bf16.msra.mxu0 %v540
  %661 = vmatpush.bf16.msra.mxu0 %v537
  %662 = vmatmul.bf16.gmra.mxu0 %v31
  %v663 = vpop.f32.mrf.mxu0
  %v664 = vadd.f32 %v377, %v663
  %v665 = vpop.f32.mrf.mxu0
  %666 = vdwg.mxu0
  %667 = vmatpush.bf16.msra.mxu0 0
  %668 = vmatpush.bf16.msra.mxu0 0
  %669 = vmatpush.bf16.msra.mxu0 0
  %670 = vmatpush.bf16.msra.mxu0 %v623
  %671 = vmatpush.bf16.msra.mxu0 %v570
  %672 = vmatpush.bf16.msra.mxu0 %v567
  %673 = vmatpush.bf16.msra.mxu0 %v564
  %674 = vmatpush.bf16.msra.mxu0 %v561
  %675 = vmatmul.bf16.gmra.mxu0 %v613
  %v676 = vpop.f32.mrf.mxu0
  %v677 = vadd.f32 %v664, %v676
  %v678 = vpop.f32.mrf.mxu0
  %679 = vdwg.mxu0
  %680 = vmatpush.bf16.msra.mxu0 %v559
  %681 = vmatpush.bf16.msra.mxu0 %v556
  %682 = vmatpush.bf16.msra.mxu0 %v553
  %683 = vmatpush.bf16.msra.mxu0 %v550
  %684 = vmatpush.bf16.msra.mxu0 %v547
  %685 = vmatpush.bf16.msra.mxu0 %v544
  %686 = vmatpush.bf16.msra.mxu0 %v541
  %687 = vmatpush.bf16.msra.mxu0 %v538
  %688 = vmatmul.bf16.gmra.mxu0 %v31
  %v689 = vpop.f32.mrf.mxu0
  %v690 = vadd.f32 %v403, %v689
  %v691 = vpop.f32.mrf.mxu0
  %692 = vdwg.mxu0
  %693 = vmatpush.bf16.msra.mxu0 0
  %694 = vmatpush.bf16.msra.mxu0 0
  %695 = vmatpush.bf16.msra.mxu0 0
  %696 = vmatpush.bf16.msra.mxu0 %v626
  %697 = vmatpush.bf16.msra.mxu0 %v571
  %698 = vmatpush.bf16.msra.mxu0 %v568
  %699 = vmatpush.bf16.msra.mxu0 %v565
  %700 = vmatpush.bf16.msra.mxu0 %v562
  %701 = vmatmul.bf16.gmra.mxu0 %v613
  %v702 = vpop.f32.mrf.mxu0
  %v703 = vadd.f32 %v690, %v702
  %v704 = vpop.f32.mrf.mxu0
  %705 = vdwg.mxu0
  %v706 = vld [vmem:[%s4] sm:$0x7]
  %v708 = vperm.slane %v706, 0
  %v709 = vperm.slane %v706, 1
  %v710 = vperm.slane %v706, 2
  %v714 = vadd.f32 %v651, %v708
  %v715 = vadd.f32 %v677, %v709
  %v716 = vadd.f32 %v703, %v710
  %vm717 = vcmp.ge.f32.partialorder %v714, 0.0
  %vm718 = vcmp.ge.f32.partialorder %v715, 0.0
  %vm719 = vcmp.ge.f32.partialorder %v716, 0.0
  %v720 = vmul.f32 %v714, 0.01
  %v721 = vmul.f32 %v715, 0.01
  %v722 = vmul.f32 %v716, 0.01
  %v723 = vsel %vm717, %v714, %v720
  %v724 = vsel %vm718, %v715, %v721
  %v725 = vsel %vm719, %v716, %v722
  %v726 = vpack.c.bf16 %v723, %v723
  %v727 = vpack.c.bf16 %v724, %v724
  %v728 = vpack.c.bf16 %v725, %v725
  %v729 = vld [vmem:[%s3] sm:$0xf]
  %v730 = vld [vmem:[%s3 + $0x4] sm:$0xf]
  %v731 = vld [vmem:[%s3 + $0x8] sm:$0xf]
  %v732 = vld [vmem:[%s3 + $0xc] sm:$0xf]
  %v733 = vld [vmem:[%s3 + $0x10] sm:$0xf]
  %v734 = vld [vmem:[%s3 + $0x14] sm:$0xf]
  %v735 = vld [vmem:[%s3 + $0x18] sm:$0xf]
  %v736 = vld [vmem:[%s3 + $0x1c] sm:$0xf]
  %v737 = vld [vmem:[%s3 + $0x20] sm:$0xf]
  %v738 = vld [vmem:[%s3 + $0x24] sm:$0xf]
  %v739 = vld [vmem:[%s3 + $0x28] sm:$0xf]
  %v740 = vld [vmem:[%s3 + $0x2c] sm:$0xf]
  %v741 = vld [vmem:[%s3 + $0x30] sm:$0xf]
  %v742 = vld [vmem:[%s3 + $0x34] sm:$0xf]
  %v743 = vld [vmem:[%s3 + $0x38] sm:$0xf]
  %v744 = vld [vmem:[%s3 + $0x3c] sm:$0xf]
  %v745 = vld [vmem:[%s3 + $0x40] sm:$0xf]
  %v746 = vld [vmem:[%s3 + $0x44] sm:$0xf]
  %v747 = vld [vmem:[%s3 + $0x48] sm:$0xf]
  %v748 = vld [vmem:[%s3 + $0x4c] sm:$0xf]
  %v749 = vld [vmem:[%s3 + $0x50] sm:$0xf]
  %v750 = vld [vmem:[%s3 + $0x54] sm:$0xf]
  %v751 = vld [vmem:[%s3 + $0x58] sm:$0xf]
  %v752 = vld [vmem:[%s3 + $0x5c] sm:$0xf]
  %v753 = vld [vmem:[%s3 + $0x60] sm:$0xf]
  %v754 = vld [vmem:[%s3 + $0x64] sm:$0xf]
  %v755 = vld [vmem:[%s3 + $0x68] sm:$0xf]
  %v756 = vld [vmem:[%s3 + $0x6c] sm:$0xf]
  %v757 = vld [vmem:[%s3 + $0x70] sm:$0xf]
  %v758 = vld [vmem:[%s3 + $0x74] sm:$0xf]
  %v759 = vld [vmem:[%s3 + $0x78] sm:$0xf]
  %v760 = vld [vmem:[%s3 + $0x7c] sm:$0xf]
  %v761 = vld [vmem:[%s3 + $0x80] sm:$0x3]
  %v762 = vld [vmem:[%s4 + $0x3] sm:$0x1]
  %v764 = vperm.slane %v762, 0
  %v799 = vunpack.c.l.b16 %v729
  %v800 = vunpack.c.l.b16 %v730
  %v801 = vunpack.c.l.b16 %v731
  %v802 = vunpack.c.l.b16 %v732
  %v803 = vunpack.c.l.b16 %v733
  %v804 = vunpack.c.l.b16 %v734
  %v805 = vunpack.c.l.b16 %v735
  %v806 = vunpack.c.l.b16 %v736
  %v807 = vunpack.c.l.b16 %v737
  %v808 = vunpack.c.l.b16 %v738
  %v809 = vunpack.c.l.b16 %v739
  %v810 = vunpack.c.l.b16 %v740
  %v811 = vunpack.c.l.b16 %v741
  %v812 = vunpack.c.l.b16 %v742
  %v813 = vunpack.c.l.b16 %v743
  %v814 = vunpack.c.l.b16 %v744
  %v815 = vunpack.c.l.b16 %v745
  %v816 = vunpack.c.l.b16 %v746
  %v817 = vunpack.c.l.b16 %v747
  %v818 = vunpack.c.l.b16 %v748
  %v819 = vunpack.c.l.b16 %v749
  %v820 = vunpack.c.l.b16 %v750
  %v821 = vunpack.c.l.b16 %v751
  %v822 = vunpack.c.l.b16 %v752
  %v823 = vunpack.c.l.b16 %v753
  %v824 = vunpack.c.l.b16 %v754
  %v825 = vunpack.c.l.b16 %v755
  %v826 = vunpack.c.l.b16 %v756
  %v827 = vunpack.c.l.b16 %v757
  %v828 = vunpack.c.l.b16 %v758
  %v829 = vunpack.c.l.b16 %v759
  %v830 = vunpack.c.l.b16 %v760
  %v831 = vunpack.c.l.b16 %v761
  %v832 = vpack.c.b16 %v800, %v799
  %v833 = vpack.c.b16 %v802, %v801
  %v834 = vpack.c.b16 %v804, %v803
  %v835 = vpack.c.b16 %v806, %v805
  %v836 = vpack.c.b16 %v808, %v807
  %v837 = vpack.c.b16 %v810, %v809
  %v838 = vpack.c.b16 %v812, %v811
  %v839 = vpack.c.b16 %v814, %v813
  %v840 = vpack.c.b16 %v816, %v815
  %v841 = vpack.c.b16 %v818, %v817
  %v842 = vpack.c.b16 %v820, %v819
  %v843 = vpack.c.b16 %v822, %v821
  %v844 = vpack.c.b16 %v824, %v823
  %v845 = vpack.c.b16 %v826, %v825
  %v846 = vpack.c.b16 %v828, %v827
  %v847 = vpack.c.b16 %v830, %v829
  %v848 = vpack.c.b16 %v831, %v831
  %vm865 = vcmask 31744
  %v867 = vsel %vm865, %v728, 0
  %vm869 = vcmask 1041408
  %v871 = vsel %vm869, %v848, 0
  %873 = vmatpush.bf16.msra.mxu0 %v839
  %874 = vmatpush.bf16.msra.mxu0 %v838
  %875 = vmatpush.bf16.msra.mxu0 %v837
  %876 = vmatpush.bf16.msra.mxu0 %v836
  %877 = vmatpush.bf16.msra.mxu0 %v835
  %878 = vmatpush.bf16.msra.mxu0 %v834
  %879 = vmatpush.bf16.msra.mxu0 %v833
  %880 = vmatpush.bf16.msra.mxu0 %v832
  %881 = vmatmul.bf16.gmra.mxu0 %v726
  %v882 = vpop.f32.mrf.mxu0
  %v883 = vadd.f32 %v764, %v882
  %v884 = vpop.f32.mrf.mxu0
  %885 = vdwg.mxu0
  %886 = vmatpush.bf16.msra.mxu0 %v847
  %887 = vmatpush.bf16.msra.mxu0 %v846
  %888 = vmatpush.bf16.msra.mxu0 %v845
  %889 = vmatpush.bf16.msra.mxu0 %v844
  %890 = vmatpush.bf16.msra.mxu0 %v843
  %891 = vmatpush.bf16.msra.mxu0 %v842
  %892 = vmatpush.bf16.msra.mxu0 %v841
  %893 = vmatpush.bf16.msra.mxu0 %v840
  %894 = vmatmul.bf16.gmra.mxu0 %v727
  %v895 = vpop.f32.mrf.mxu0
  %v896 = vadd.f32 %v883, %v895
  %v897 = vpop.f32.mrf.mxu0
  %898 = vdwg.mxu0
  %899 = vmatpush.bf16.msra.mxu0 0
  %900 = vmatpush.bf16.msra.mxu0 0
  %901 = vmatpush.bf16.msra.mxu0 0
  %902 = vmatpush.bf16.msra.mxu0 0
  %903 = vmatpush.bf16.msra.mxu0 0
  %904 = vmatpush.bf16.msra.mxu0 0
  %905 = vmatpush.bf16.msra.mxu0 0
  %906 = vmatpush.bf16.msra.mxu0 %v871
  %907 = vmatmul.bf16.gmra.mxu0 %v867
  %v908 = vpop.f32.mrf.mxu0
  %v909 = vadd.f32 %v896, %v908
  %v910 = vpop.f32.mrf.mxu0
  %911 = vdwg.mxu0
  %vm912 = vcmp.ge.f32.partialorder %v909, 0.0
  %v913 = vmul.f32 %v909, 0.01
  %v914 = vsel %vm912, %v909, %v913
  %v915 = vld [vmem:[%s4 + $0x4] sm:$0x1]
  %v917 = vperm.slane %v915, 0
  %v919 = vmul.f32 %v914, %v917
  %vm920 = vcmask 58368
  %v921 = vsel %vm920, %v919, 0.0
  %922 = vadd.xlane.f32.xlu0 %v921
  %v923 = vpop.xlane.xlu0 %922
  %vm924 = vcmask 1024
  %925 = vst.msk [vmem:[%s5] sm:$0x3] %vm924, %v923
  // Predicated region
  $region22: #{conditional_critic.1} parent=0 // pred_check
    _
  $region23: #{conditional_critic.1} parent=0 // pred_check_branch
    %927 = sbr.rel (0) target = $region25
  $region24: #{conditional_critic.1} parent=0 // pred_region
    _
  $region25: #{conditional_critic.1} parent=0 // pred_fallthru
    _
  // Predicated region
  $region26: #{conditional_critic.1} parent=0 // pred_check
    _
  $region27: #{conditional_critic.1} parent=0 // pred_check_branch
    %929 = sbr.rel (0) target = $region29
  $region28: #{conditional_critic.1} parent=0 // pred_region
    _
  $region29: #{conditional_critic.1} parent=0 // pred_fallthru
    _

</llo_original>
